<compile_context>
chip_gen: v5e
topology: v5e:2x2
jax: 0.10.0
libtpu: 0.0.40
codegen_flags: <defaults>
</compile_context>

<pallas_src>
import jax
import jax.numpy as jnp
from jax.experimental import pallas as pl
from jax.experimental.pallas import tpu as pltpu

H1 = 64        # fc1 out features (model spec)
H2 = 128       # fc2 out features (model spec)
H_PAD = 128    # lane-dense padded hidden width for fc1 output / fc2 input
OUT_PAD = 128  # lane-dense padded width of the fused actor+critic head output


def actor_critic_kernel(x_ref, w1_ref, b1_ref, w2_ref, b2_ref, wh_ref, bh_ref, out_ref):
    x = x_ref[...]                                                     # (bt, in_dim) bf16

    # fc1 + ReLU  (MXU bf16 -> f32 accumulate; bias/ReLU in f32; bf16 for next MXU pass)
    h1 = jnp.dot(x, w1_ref[...], preferred_element_type=jnp.float32) + b1_ref[...]
    h1 = jnp.maximum(h1, 0.0).astype(jnp.bfloat16)                     # (bt, 128)

    # fc2 + ReLU
    h2 = jnp.dot(h1, w2_ref[...], preferred_element_type=jnp.float32) + b2_ref[...]
    h2 = jnp.maximum(h2, 0.0).astype(jnp.bfloat16)                     # (bt, 128)

    # fused actor+critic head -> single lane-dense 128-wide output store
    out_ref[...] = (jnp.dot(h2, wh_ref[...], preferred_element_type=jnp.float32)
                    + bh_ref[...]).astype(out_ref.dtype)               # (bt, 128)


def init_params(key, input_dim, n_actions):
    """PyTorch nn.Linear-style init (uniform +-1/sqrt(fan_in)), f32,
    weights stored as (in_features, out_features), biases as (1, out_features)."""
    def linear(k, fan_in, fan_out):
        kw, kb = jax.random.split(k)
        bound = 1.0 / jnp.sqrt(fan_in)
        w = jax.random.uniform(kw, (fan_in, fan_out), jnp.float32, -bound, bound)
        b = jax.random.uniform(kb, (1, fan_out), jnp.float32, -bound, bound)
        return w, b

    k1, k2, k3, k4 = jax.random.split(key, 4)
    w1, b1 = linear(k1, input_dim, H1)
    w2, b2 = linear(k2, H1, H2)
    wa, ba = linear(k3, H2, n_actions)
    wc, bc = linear(k4, H2, 1)
    return dict(w1=w1, b1=b1, w2=w2, b2=b2, wa=wa, ba=ba, wc=wc, bc=bc)


def prepare_params(p):
    """One-time prep: zero-pad hidden dims to 128 lanes, fuse actor+critic heads into
    one (128, 128) weight, cast weights to bf16 (biases stay f32). Exact semantics."""
    input_dim = p["w1"].shape[0]
    n_actions = p["wa"].shape[1]

    # fc1: pad out-features 64 -> 128 with zeros (padded lanes stay 0 through ReLU)
    w1 = jnp.zeros((input_dim, H_PAD), jnp.float32).at[:, :H1].set(p["w1"])
    b1 = jnp.zeros((1, H_PAD), jnp.float32).at[:, :H1].set(p["b1"])

    # fc2: pad in-features 64 -> 128 with zero rows (exact)
    w2 = jnp.zeros((H_PAD, H2), jnp.float32).at[:H1, :].set(p["w2"])
    b2 = p["b2"]

    # fused head: [actor | critic | zero-pad] -> (128, 128)
    wh = (jnp.zeros((H2, OUT_PAD), jnp.float32)
          .at[:, :n_actions].set(p["wa"])
          .at[:, n_actions:n_actions + 1].set(p["wc"]))
    bh = (jnp.zeros((1, OUT_PAD), jnp.float32)
          .at[:, :n_actions].set(p["ba"])
          .at[:, n_actions:n_actions + 1].set(p["bc"]))

    return dict(
        w1=w1.astype(jnp.bfloat16), b1=b1,
        w2=w2.astype(jnp.bfloat16), b2=b2,
        wh=wh.astype(jnp.bfloat16), bh=bh,
    )


def actor_critic_forward(x, kp, n_actions):
    B, input_dim = x.shape
    # batch tile: single tile for small B; 256-row tiles (VMEM-safe on v7x's 64 MiB) for big B
    bt = B if B <= 256 else 256
    assert B % bt == 0, "batch must be a multiple of the batch tile"
    grid = (B // bt,)

    x_bf = x.astype(jnp.bfloat16)

    flops = 2 * B * (input_dim * H_PAD + H_PAD * H2 + H2 * OUT_PAD)
    bytes_accessed = (x_bf.size * 2
                      + (kp["w1"].size + kp["w2"].size + kp["wh"].size) * 2
                      + (kp["b1"].size + kp["b2"].size + kp["bh"].size) * 4
                      + B * OUT_PAD * 4)

    def resident(shape):  # weights/biases: same block for every batch tile
        return pl.BlockSpec(shape, lambda i: (0, 0))

    out = pl.pallas_call(
        actor_critic_kernel,
        out_shape=jax.ShapeDtypeStruct((B, OUT_PAD), jnp.float32),
        grid=grid,
        in_specs=[
            pl.BlockSpec((bt, input_dim), lambda i: (i, 0)),   # x batch tile
            resident(kp["w1"].shape), resident(kp["b1"].shape),
            resident(kp["w2"].shape), resident(kp["b2"].shape),
            resident(kp["wh"].shape), resident(kp["bh"].shape),
        ],
        out_specs=pl.BlockSpec((bt, OUT_PAD), lambda i: (i, 0)),
        compiler_params=pltpu.CompilerParams(dimension_semantics=("parallel",)),
        cost_estimate=pl.CostEstimate(flops=flops, transcendentals=0,
                                      bytes_accessed=bytes_accessed),
    )(x_bf, kp["w1"], kp["b1"], kp["w2"], kp["b2"], kp["wh"], kp["bh"])

    actor = out[:, :n_actions]
    critic = out[:, n_actions:n_actions + 1]
    return actor, critic


def reference_forward(x, p):
    """Pure-JAX f32 reference matching the PyTorch module semantics."""
    h1 = jnp.maximum(x @ p["w1"] + p["b1"], 0.0)
    h2 = jnp.maximum(h1 @ p["w2"] + p["b2"], 0.0)
    return h2 @ p["wa"] + p["ba"], h2 @ p["wc"] + p["bc"]


if __name__ == "__main__":
    batch = 8
    input_dim = 32
    n_actions = 4

    key = jax.random.PRNGKey(0)
    k_params, k_x = jax.random.split(key)
    params = init_params(k_params, input_dim, n_actions)
    kernel_params = prepare_params(params)
    x = jax.random.normal(k_x, (batch, input_dim), jnp.float32)

    actor_logits, critic_value = actor_critic_forward(x, kernel_params, n_actions)
    jax.block_until_ready((actor_logits, critic_value))

    # sanity check against the pure-JAX f32 reference (bf16 weights -> loose tolerance)
    ref_actor, ref_critic = reference_forward(x, params)
    assert actor_logits.shape == (batch, n_actions)
    assert critic_value.shape == (batch, 1)
    assert jnp.allclose(actor_logits, ref_actor, atol=3e-2, rtol=3e-2)
    assert jnp.allclose(critic_value, ref_critic, atol=3e-2, rtol=3e-2)

    print("KERNEL_OK")
</pallas_src>

<mosaic_0001>
module attributes {stable_mosaic.version = 11 : i64} {
  func.func @actor_critic_kernel(%arg0: i32, %arg1: memref<8x32xbf16, #tpu.memory_space<vmem>>, %arg2: memref<32x128xbf16, #tpu.memory_space<vmem>>, %arg3: memref<1x128xf32, #tpu.memory_space<vmem>>, %arg4: memref<128x128xbf16, #tpu.memory_space<vmem>>, %arg5: memref<1x128xf32, #tpu.memory_space<vmem>>, %arg6: memref<128x128xbf16, #tpu.memory_space<vmem>>, %arg7: memref<1x128xf32, #tpu.memory_space<vmem>>, %arg8: memref<8x128xf32, #tpu.memory_space<vmem>>) attributes {dimension_semantics = [#tpu.dimension_semantics<parallel>], iteration_bounds = array<i64: 1>, scalar_prefetch = 0 : i64, scratch_operands = 0 : i64, tpu.core_type = #tpu.core_type<tc>, window_params = [{transform_indices = @transform_0, window_bounds = array<i64: 8, 32>}, {pipeline_mode = #tpu.pipeline_mode<synchronous>, transform_indices = @transform_1, window_bounds = array<i64: 32, 128>}, {pipeline_mode = #tpu.pipeline_mode<synchronous>, transform_indices = @transform_2, window_bounds = array<i64: 1, 128>}, {pipeline_mode = #tpu.pipeline_mode<synchronous>, transform_indices = @transform_3, window_bounds = array<i64: 128, 128>}, {pipeline_mode = #tpu.pipeline_mode<synchronous>, transform_indices = @transform_4, window_bounds = array<i64: 1, 128>}, {pipeline_mode = #tpu.pipeline_mode<synchronous>, transform_indices = @transform_5, window_bounds = array<i64: 128, 128>}, {pipeline_mode = #tpu.pipeline_mode<synchronous>, transform_indices = @transform_6, window_bounds = array<i64: 1, 128>}, {transform_indices = @transform_7, window_bounds = array<i64: 8, 128>}]} {
    %c0 = arith.constant 0 : index
    %c0_0 = arith.constant 0 : index
    %0 = vector.load %arg1[%c0, %c0_0] : memref<8x32xbf16, #tpu.memory_space<vmem>>, vector<8x32xbf16>
    %c0_1 = arith.constant 0 : index
    %c0_2 = arith.constant 0 : index
    %1 = vector.load %arg2[%c0_1, %c0_2] : memref<32x128xbf16, #tpu.memory_space<vmem>>, vector<32x128xbf16>
    %cst = arith.constant dense<0.000000e+00> : vector<8x128xf32>
    %2 = tpu.matmul %0, %1, %cst {dimension_numbers = #tpu.dot_dimension_numbers<[1], [0], [0], [1], [0, 0, 1, 1], [], []>} : vector<8x32xbf16>, vector<32x128xbf16>, vector<8x128xf32> -> vector<8x128xf32>
    %c0_3 = arith.constant 0 : index
    %c0_4 = arith.constant 0 : index
    %3 = vector.load %arg3[%c0_3, %c0_4] : memref<1x128xf32, #tpu.memory_space<vmem>>, vector<1x128xf32>
    %4 = vector.broadcast %3 : vector<1x128xf32> to vector<8x128xf32>
    %5 = arith.addf %2, %4 : vector<8x128xf32>
    %cst_5 = arith.constant 0.000000e+00 : f32
    %6 = vector.broadcast %cst_5 : f32 to vector<8x128xf32>
    %7 = arith.maximumf %5, %6 : vector<8x128xf32>
    %8 = arith.truncf %7 : vector<8x128xf32> to vector<8x128xbf16>
    %c0_6 = arith.constant 0 : index
    %c0_7 = arith.constant 0 : index
    %9 = vector.load %arg4[%c0_6, %c0_7] : memref<128x128xbf16, #tpu.memory_space<vmem>>, vector<128x128xbf16>
    %cst_8 = arith.constant dense<0.000000e+00> : vector<8x128xf32>
    %10 = tpu.matmul %8, %9, %cst_8 {dimension_numbers = #tpu.dot_dimension_numbers<[1], [0], [0], [1], [0, 0, 1, 1], [], []>} : vector<8x128xbf16>, vector<128x128xbf16>, vector<8x128xf32> -> vector<8x128xf32>
    %c0_9 = arith.constant 0 : index
    %c0_10 = arith.constant 0 : index
    %11 = vector.load %arg5[%c0_9, %c0_10] : memref<1x128xf32, #tpu.memory_space<vmem>>, vector<1x128xf32>
    %12 = vector.broadcast %11 : vector<1x128xf32> to vector<8x128xf32>
    %13 = arith.addf %10, %12 : vector<8x128xf32>
    %cst_11 = arith.constant 0.000000e+00 : f32
    %14 = vector.broadcast %cst_11 : f32 to vector<8x128xf32>
    %15 = arith.maximumf %13, %14 : vector<8x128xf32>
    %16 = arith.truncf %15 : vector<8x128xf32> to vector<8x128xbf16>
    %c0_12 = arith.constant 0 : index
    %c0_13 = arith.constant 0 : index
    %17 = vector.load %arg6[%c0_12, %c0_13] : memref<128x128xbf16, #tpu.memory_space<vmem>>, vector<128x128xbf16>
    %cst_14 = arith.constant dense<0.000000e+00> : vector<8x128xf32>
    %18 = tpu.matmul %16, %17, %cst_14 {dimension_numbers = #tpu.dot_dimension_numbers<[1], [0], [0], [1], [0, 0, 1, 1], [], []>} : vector<8x128xbf16>, vector<128x128xbf16>, vector<8x128xf32> -> vector<8x128xf32>
    %c0_15 = arith.constant 0 : index
    %c0_16 = arith.constant 0 : index
    %19 = vector.load %arg7[%c0_15, %c0_16] : memref<1x128xf32, #tpu.memory_space<vmem>>, vector<1x128xf32>
    %20 = vector.broadcast %19 : vector<1x128xf32> to vector<8x128xf32>
    %21 = arith.addf %18, %20 : vector<8x128xf32>
    %c0_17 = arith.constant 0 : index
    %c0_18 = arith.constant 0 : index
    %22 = vector.load %arg8[%c0_17, %c0_18] : memref<8x128xf32, #tpu.memory_space<vmem>>, vector<8x128xf32>
    tpu.vector_store %arg8[%c0_17, %c0_18], %21 {strides = array<i32>} : memref<8x128xf32, #tpu.memory_space<vmem>>, vector<8x128xf32>,
    return
  }
  func.func @transform_0(%arg0: i32) -> (i32, i32) {
    %c0_i32 = arith.constant 0 : i32
    %c0_i32_0 = arith.constant 0 : i32
    return %arg0, %c0_i32 : i32, i32
  }
  func.func @transform_1(%arg0: i32) -> (i32, i32) {
    %c0_i32 = arith.constant 0 : i32
    %c0_i32_0 = arith.constant 0 : i32
    %c0_i32_1 = arith.constant 0 : i32
    return %c0_i32, %c0_i32_0 : i32, i32
  }
  func.func @transform_2(%arg0: i32) -> (i32, i32) {
    %c0_i32 = arith.constant 0 : i32
    %c0_i32_0 = arith.constant 0 : i32
    %c0_i32_1 = arith.constant 0 : i32
    return %c0_i32, %c0_i32_0 : i32, i32
  }
  func.func @transform_3(%arg0: i32) -> (i32, i32) {
    %c0_i32 = arith.constant 0 : i32
    %c0_i32_0 = arith.constant 0 : i32
    %c0_i32_1 = arith.constant 0 : i32
    return %c0_i32, %c0_i32_0 : i32, i32
  }
  func.func @transform_4(%arg0: i32) -> (i32, i32) {
    %c0_i32 = arith.constant 0 : i32
    %c0_i32_0 = arith.constant 0 : i32
    %c0_i32_1 = arith.constant 0 : i32
    return %c0_i32, %c0_i32_0 : i32, i32
  }
  func.func @transform_5(%arg0: i32) -> (i32, i32) {
    %c0_i32 = arith.constant 0 : i32
    %c0_i32_0 = arith.constant 0 : i32
    %c0_i32_1 = arith.constant 0 : i32
    return %c0_i32, %c0_i32_0 : i32, i32
  }
  func.func @transform_6(%arg0: i32) -> (i32, i32) {
    %c0_i32 = arith.constant 0 : i32
    %c0_i32_0 = arith.constant 0 : i32
    %c0_i32_1 = arith.constant 0 : i32
    return %c0_i32, %c0_i32_0 : i32, i32
  }
  func.func @transform_7(%arg0: i32) -> (i32, i32) {
    %c0_i32 = arith.constant 0 : i32
    %c0_i32_0 = arith.constant 0 : i32
    return %arg0, %c0_i32 : i32, i32
  }
}

</mosaic_0001>

<llo_original>
// kernel: tpu_custom_call.1
$region0: #{tpu_custom_call.1}
  #allocation0 [shape = 'u32[]', space=smem, size = 0x4, offset = 0x4, fixed_abs, tag = 'smem constant byte address 0x4 - core index']
  #allocation1 [shape = 'u32[72,128]{1,0:T(1,128)}', space=vmem, size = 0x9000, scoped, tag = 'internal scratch']
  %s0 = inlined_call_operand.hbm [shape: bf16[8,32], index: 0, kind: input, shape index: {}]
  %s1 = inlined_call_operand.hbm [shape: bf16[32,128], index: 1, kind: input, shape index: {}]
  %s2 = inlined_call_operand.vmem [shape: f32[1,128], index: 2, kind: input, shape index: {}]
  %s3 = inlined_call_operand.hbm [shape: bf16[128,128], index: 3, kind: input, shape index: {}]
  %s4 = inlined_call_operand.vmem [shape: f32[1,128], index: 4, kind: input, shape index: {}]
  %s5 = inlined_call_operand.hbm [shape: bf16[128,128], index: 5, kind: input, shape index: {}]
  %s6 = inlined_call_operand.vmem [shape: f32[1,128], index: 6, kind: input, shape index: {}]
  %s7 = inlined_call_operand.hbm [shape: f32[8,128], index: 7, kind: output, shape index: {}]
  %s8 = sld [smem:[#allocation0]]
  $region54: #{tpu_custom_call.1} parent=0
    _
  %s10 = ssub.s32 1, %s8
  %s11 = scalar_select 0, %s10, %s8
  $region1: #{tpu_custom_call.1} parent=0
    #allocation2 [shape = 'u8[2048]{0}', space=vmem, size = 0x800, scoped, tag = 'input window, operand 0, single buffered']
    #allocation3 [shape = 's32[1]{0}', space=sflag, size = 0x4, scoped, tag = 'scoped memory for tpu_custom_call.1']
    #allocation4 [shape = 's32[1]{0}', space=sflag, size = 0x4, scoped, tag = 'scoped memory for tpu_custom_call.1']
    #allocation5 [shape = 'u8[8192]{0}', space=vmem, size = 0x2000, scoped, tag = 'input window, operand 1, single buffered']
    #allocation6 [shape = 's32[1]{0}', space=sflag, size = 0x4, scoped, tag = 'scoped memory for tpu_custom_call.1']
    #allocation7 [shape = 'u8[32768]{0}', space=vmem, size = 0x8000, scoped, tag = 'input window, operand 3, single buffered']
    #allocation8 [shape = 'u8[32768]{0}', space=vmem, size = 0x8000, scoped, tag = 'input window, operand 5, single buffered']
    #allocation9 [shape = 's32[1]{0}', space=sflag, size = 0x4, scoped, tag = 'scoped memory for tpu_custom_call.1']
    #allocation10 [shape = 'u8[4096]{0}', space=vmem, size = 0x1000, scoped, tag = 'output window, operand 0, single buffered']
    %12 = vsyncpa [#allocation3], 0
    %13 = vsyncpa [#allocation6], 0
    %14 = vsyncpa [#allocation9], 0
    %15 = vsyncpa [#allocation4], 0
    // Predicated region
    $region2: #{tpu_custom_call.1} parent=1 // pred_check
      _
    $region3: #{tpu_custom_call.1} parent=1 // pred_check_branch
      %17 = sbr.rel (0) target = $region5
    $region4: #{tpu_custom_call.1} parent=1 // pred_region
      %19 = vsyncadd [#allocation3], 0
      %s21 = sshll.u32 %s0, 4
      %s22 = int_to_ptr.hbm [resolvable:$true] %s21
      %s23 = sshll.u32 [#allocation2], 4
      %s24 = int_to_ptr.vmem [resolvable:$true] %s23
      %26 = dma.hbm_to_vmem [thread:$0]  %s22, 64, %s24, [#allocation3]
    $region5: #{tpu_custom_call.1} parent=1 // pred_fallthru
      _
    // Predicated region
    $region6: #{tpu_custom_call.1} parent=1 // pred_check
      _
    $region7: #{tpu_custom_call.1} parent=1 // pred_check_branch
      %28 = sbr.rel (0) target = $region9
    $region8: #{tpu_custom_call.1} parent=1 // pred_region
      %30 = vsyncadd [#allocation6], 0
      %s31 = sshll.u32 %s1, 4
      %s32 = int_to_ptr.hbm [resolvable:$true] %s31
      %s33 = sshll.u32 [#allocation5], 4
      %s34 = int_to_ptr.vmem [resolvable:$true] %s33
      %39 = dma.hbm_to_vmem [thread:$0]  %s32, 256, %s34, [#allocation6], 64, 64, 4
    $region9: #{tpu_custom_call.1} parent=1 // pred_fallthru
      _
    // Predicated region
    $region10: #{tpu_custom_call.1} parent=1 // pred_check
      _
    $region11: #{tpu_custom_call.1} parent=1 // pred_check_branch
      %41 = sbr.rel (0) target = $region13
    $region12: #{tpu_custom_call.1} parent=1 // pred_region
      _
    $region13: #{tpu_custom_call.1} parent=1 // pred_fallthru
      _
    // Predicated region
    $region14: #{tpu_custom_call.1} parent=1 // pred_check
      _
    $region15: #{tpu_custom_call.1} parent=1 // pred_check_branch
      %43 = sbr.rel (0) target = $region17
    $region16: #{tpu_custom_call.1} parent=1 // pred_region
      %45 = vsyncadd [#allocation6], 0
      %s46 = sshll.u32 %s3, 4
      %s47 = int_to_ptr.hbm [resolvable:$true] %s46
      %s48 = sshll.u32 [#allocation7], 4
      %s49 = int_to_ptr.vmem [resolvable:$true] %s48
      %54 = dma.hbm_to_vmem [thread:$0]  %s47, 1024, %s49, [#allocation6], 64, 64, 4
    $region17: #{tpu_custom_call.1} parent=1 // pred_fallthru
      _
    // Predicated region
    $region18: #{tpu_custom_call.1} parent=1 // pred_check
      _
    $region19: #{tpu_custom_call.1} parent=1 // pred_check_branch
      %56 = sbr.rel (0) target = $region21
    $region20: #{tpu_custom_call.1} parent=1 // pred_region
      _
    $region21: #{tpu_custom_call.1} parent=1 // pred_fallthru
      _
    // Predicated region
    $region22: #{tpu_custom_call.1} parent=1 // pred_check
      _
    $region23: #{tpu_custom_call.1} parent=1 // pred_check_branch
      %58 = sbr.rel (0) target = $region25
    $region24: #{tpu_custom_call.1} parent=1 // pred_region
      %60 = vsyncadd [#allocation9], 0
      %s61 = sshll.u32 %s5, 4
      %s62 = int_to_ptr.hbm [resolvable:$true] %s61
      %s63 = sshll.u32 [#allocation8], 4
      %s64 = int_to_ptr.vmem [resolvable:$true] %s63
      %69 = dma.hbm_to_vmem [thread:$0]  %s62, 1024, %s64, [#allocation9], 64, 64, 4
    $region25: #{tpu_custom_call.1} parent=1 // pred_fallthru
      _
    // Predicated region
    $region26: #{tpu_custom_call.1} parent=1 // pred_check
      _
    $region27: #{tpu_custom_call.1} parent=1 // pred_check_branch
      %71 = sbr.rel (0) target = $region29
    $region28: #{tpu_custom_call.1} parent=1 // pred_region
      _
    $region29: #{tpu_custom_call.1} parent=1 // pred_fallthru
      _
    // Predicated region
    $region30: #{tpu_custom_call.1} parent=1 // pred_check
      _
    $region31: #{tpu_custom_call.1} parent=1 // pred_check_branch
      %73 = sbr.rel (0) target = $region33
    $region32: #{tpu_custom_call.1} parent=1 // pred_region
      %75 = dma.done [#allocation3], 64
    $region33: #{tpu_custom_call.1} parent=1 // pred_fallthru
      _
    // Predicated region
    $region34: #{tpu_custom_call.1} parent=1 // pred_check
      _
    $region35: #{tpu_custom_call.1} parent=1 // pred_check_branch
      %77 = sbr.rel (0) target = $region37
    $region36: #{tpu_custom_call.1} parent=1 // pred_region
      %79 = dma.done [#allocation6], 256
    $region37: #{tpu_custom_call.1} parent=1 // pred_fallthru
      _
    // Predicated region
    $region38: #{tpu_custom_call.1} parent=1 // pred_check
      _
    $region39: #{tpu_custom_call.1} parent=1 // pred_check_branch
      %81 = sbr.rel (0) target = $region41
    $region40: #{tpu_custom_call.1} parent=1 // pred_region
      %83 = dma.done [#allocation6], 1024
    $region41: #{tpu_custom_call.1} parent=1 // pred_fallthru
      _
    // Predicated region
    $region42: #{tpu_custom_call.1} parent=1 // pred_check
      _
    $region43: #{tpu_custom_call.1} parent=1 // pred_check_branch
      %85 = sbr.rel (0) target = $region45
    $region44: #{tpu_custom_call.1} parent=1 // pred_region
      %87 = dma.done [#allocation9], 1024
    $region45: #{tpu_custom_call.1} parent=1 // pred_fallthru
      _
    %v89 = vld [vmem:[#allocation2] sm:$0xf]
    %v90 = vld [vmem:[#allocation5] sm:$0xf]
    %v91 = vld [vmem:[#allocation5 + $0x4] sm:$0xf]
    %v92 = vld [vmem:[#allocation5 + $0x8] sm:$0xf]
    %v93 = vld [vmem:[#allocation5 + $0xc] sm:$0xf]
    %v94 = vld [vmem:[%s2] sm:$0x1]
    %v96 = vperm.slane %v94, 0
    %v102 = vunpack.c.l.b16 %v90
    %v103 = vunpack.c.l.b16 %v91
    %v104 = vunpack.c.l.b16 %v92
    %v105 = vunpack.c.l.b16 %v93
    %v106 = vpack.c.b16 %v103, %v102
    %v107 = vpack.c.b16 %v105, %v104
    %vm110 = vcmask 261120
    %v112 = vsel %vm110, %v89, 0
    %114 = vmatpush.bf16.msra.mxu0 0
    %115 = vmatpush.bf16.msra.mxu0 0
    %116 = vmatpush.bf16.msra.mxu0 0
    %117 = vmatpush.bf16.msra.mxu0 0
    %118 = vmatpush.bf16.msra.mxu0 0
    %119 = vmatpush.bf16.msra.mxu0 0
    %120 = vmatpush.bf16.msra.mxu0 %v107
    %121 = vmatpush.bf16.msra.mxu0 %v106
    %122 = vmatmul.bf16.gmra.mxu0 %v112
    %v123 = vpop.f32.mrf.mxu0
    %v124 = vadd.f32 %v96, %v123
    %v125 = vpop.f32.mrf.mxu0
    %126 = vdwg.mxu0
    %v127 = vmax.f32 %v124, 0.0
    %v128 = vpack.c.bf16 %v127, %v127
    %v129 = vld [vmem:[#allocation7] sm:$0xf]
    %v130 = vld [vmem:[#allocation7 + $0x4] sm:$0xf]
    %v131 = vld [vmem:[#allocation7 + $0x8] sm:$0xf]
    %v132 = vld [vmem:[#allocation7 + $0xc] sm:$0xf]
    %v133 = vld [vmem:[#allocation7 + $0x10] sm:$0xf]
    %v134 = vld [vmem:[#allocation7 + $0x14] sm:$0xf]
    %v135 = vld [vmem:[#allocation7 + $0x18] sm:$0xf]
    %v136 = vld [vmem:[#allocation7 + $0x1c] sm:$0xf]
    %v137 = vld [vmem:[#allocation7 + $0x20] sm:$0xf]
    %v138 = vld [vmem:[#allocation7 + $0x24] sm:$0xf]
    %v139 = vld [vmem:[#allocation7 + $0x28] sm:$0xf]
    %v140 = vld [vmem:[#allocation7 + $0x2c] sm:$0xf]
    %v141 = vld [vmem:[#allocation7 + $0x30] sm:$0xf]
    %v142 = vld [vmem:[#allocation7 + $0x34] sm:$0xf]
    %v143 = vld [vmem:[#allocation7 + $0x38] sm:$0xf]
    %v144 = vld [vmem:[#allocation7 + $0x3c] sm:$0xf]
    %v145 = vld [vmem:[%s4] sm:$0x1]
    %v147 = vperm.slane %v145, 0
    %v165 = vunpack.c.l.b16 %v129
    %v166 = vunpack.c.l.b16 %v130
    %v167 = vunpack.c.l.b16 %v131
    %v168 = vunpack.c.l.b16 %v132
    %v169 = vunpack.c.l.b16 %v133
    %v170 = vunpack.c.l.b16 %v134
    %v171 = vunpack.c.l.b16 %v135
    %v172 = vunpack.c.l.b16 %v136
    %v173 = vunpack.c.l.b16 %v137
    %v174 = vunpack.c.l.b16 %v138
    %v175 = vunpack.c.l.b16 %v139
    %v176 = vunpack.c.l.b16 %v140
    %v177 = vunpack.c.l.b16 %v141
    %v178 = vunpack.c.l.b16 %v142
    %v179 = vunpack.c.l.b16 %v143
    %v180 = vunpack.c.l.b16 %v144
    %v181 = vpack.c.b16 %v166, %v165
    %v182 = vpack.c.b16 %v168, %v167
    %v183 = vpack.c.b16 %v170, %v169
    %v184 = vpack.c.b16 %v172, %v171
    %v185 = vpack.c.b16 %v174, %v173
    %v186 = vpack.c.b16 %v176, %v175
    %v187 = vpack.c.b16 %v178, %v177
    %v188 = vpack.c.b16 %v180, %v179
    %197 = vmatpush.bf16.msra.mxu0 %v188
    %198 = vmatpush.bf16.msra.mxu0 %v187
    %199 = vmatpush.bf16.msra.mxu0 %v186
    %200 = vmatpush.bf16.msra.mxu0 %v185
    %201 = vmatpush.bf16.msra.mxu0 %v184
    %202 = vmatpush.bf16.msra.mxu0 %v183
    %203 = vmatpush.bf16.msra.mxu0 %v182
    %204 = vmatpush.bf16.msra.mxu0 %v181
    %205 = vmatmul.bf16.gmra.mxu0 %v128
    %v206 = vpop.f32.mrf.mxu0
    %v207 = vadd.f32 %v147, %v206
    %v208 = vpop.f32.mrf.mxu0
    %209 = vdwg.mxu0
    %v210 = vmax.f32 %v207, 0.0
    %v211 = vpack.c.bf16 %v210, %v210
    %v212 = vld [vmem:[#allocation8] sm:$0xf]
    %v213 = vld [vmem:[#allocation8 + $0x4] sm:$0xf]
    %v214 = vld [vmem:[#allocation8 + $0x8] sm:$0xf]
    %v215 = vld [vmem:[#allocation8 + $0xc] sm:$0xf]
    %v216 = vld [vmem:[#allocation8 + $0x10] sm:$0xf]
    %v217 = vld [vmem:[#allocation8 + $0x14] sm:$0xf]
    %v218 = vld [vmem:[#allocation8 + $0x18] sm:$0xf]
    %v219 = vld [vmem:[#allocation8 + $0x1c] sm:$0xf]
    %v220 = vld [vmem:[#allocation8 + $0x20] sm:$0xf]
    %v221 = vld [vmem:[#allocation8 + $0x24] sm:$0xf]
    %v222 = vld [vmem:[#allocation8 + $0x28] sm:$0xf]
    %v223 = vld [vmem:[#allocation8 + $0x2c] sm:$0xf]
    %v224 = vld [vmem:[#allocation8 + $0x30] sm:$0xf]
    %v225 = vld [vmem:[#allocation8 + $0x34] sm:$0xf]
    %v226 = vld [vmem:[#allocation8 + $0x38] sm:$0xf]
    %v227 = vld [vmem:[#allocation8 + $0x3c] sm:$0xf]
    %v228 = vld [vmem:[%s6] sm:$0x1]
    %v230 = vperm.slane %v228, 0
    %v248 = vunpack.c.l.b16 %v212
    %v249 = vunpack.c.l.b16 %v213
    %v250 = vunpack.c.l.b16 %v214
    %v251 = vunpack.c.l.b16 %v215
    %v252 = vunpack.c.l.b16 %v216
    %v253 = vunpack.c.l.b16 %v217
    %v254 = vunpack.c.l.b16 %v218
    %v255 = vunpack.c.l.b16 %v219
    %v256 = vunpack.c.l.b16 %v220
    %v257 = vunpack.c.l.b16 %v221
    %v258 = vunpack.c.l.b16 %v222
    %v259 = vunpack.c.l.b16 %v223
    %v260 = vunpack.c.l.b16 %v224
    %v261 = vunpack.c.l.b16 %v225
    %v262 = vunpack.c.l.b16 %v226
    %v263 = vunpack.c.l.b16 %v227
    %v264 = vpack.c.b16 %v249, %v248
    %v265 = vpack.c.b16 %v251, %v250
    %v266 = vpack.c.b16 %v253, %v252
    %v267 = vpack.c.b16 %v255, %v254
    %v268 = vpack.c.b16 %v257, %v256
    %v269 = vpack.c.b16 %v259, %v258
    %v270 = vpack.c.b16 %v261, %v260
    %v271 = vpack.c.b16 %v263, %v262
    %280 = vmatpush.bf16.msra.mxu0 %v271
    %281 = vmatpush.bf16.msra.mxu0 %v270
    %282 = vmatpush.bf16.msra.mxu0 %v269
    %283 = vmatpush.bf16.msra.mxu0 %v268
    %284 = vmatpush.bf16.msra.mxu0 %v267
    %285 = vmatpush.bf16.msra.mxu0 %v266
    %286 = vmatpush.bf16.msra.mxu0 %v265
    %287 = vmatpush.bf16.msra.mxu0 %v264
    %288 = vmatmul.bf16.gmra.mxu0 %v211
    %v289 = vpop.f32.mrf.mxu0
    %v290 = vadd.f32 %v230, %v289
    %v291 = vpop.f32.mrf.mxu0
    %292 = vdwg.mxu0
    %293 = vst [vmem:[#allocation10] sm:$0xff] %v290
    // Predicated region
    $region46: #{tpu_custom_call.1} parent=1 // pred_check
      _
    $region47: #{tpu_custom_call.1} parent=1 // pred_check_branch
      %295 = sbr.rel (0) target = $region49
    $region48: #{tpu_custom_call.1} parent=1 // pred_region
      %297 = vsyncadd [#allocation4], 0
      %s299 = sshll.u32 [#allocation10], 4
      %s300 = int_to_ptr.vmem [resolvable:$true] %s299
      %s301 = sshll.u32 %s7, 4
      %s302 = int_to_ptr.hbm [resolvable:$true] %s301
      %304 = dma.vmem_to_hbm [thread:$0]  %s300, 128, %s302, [#allocation4]
    $region49: #{tpu_custom_call.1} parent=1 // pred_fallthru
      _
    // Predicated region
    $region50: #{tpu_custom_call.1} parent=1 // pred_check
      _
    $region51: #{tpu_custom_call.1} parent=1 // pred_check_branch
      %306 = sbr.rel (0) target = $region53
    $region52: #{tpu_custom_call.1} parent=1 // pred_region
      %308 = dma.done [#allocation4], 128
    $region53: #{tpu_custom_call.1} parent=1 // pred_fallthru
      _
    %309 = vsyncpa [#allocation3], 1
    %310 = vsyncpa [#allocation6], 1
    %311 = vsyncpa [#allocation9], 1
    %312 = vsyncpa [#allocation4], 1

</llo_original>
